<compile_context>
chip_gen: v5e
topology: v5e:2x2
jax: 0.10.0
libtpu: 0.0.40
codegen_flags: <defaults>
</compile_context>

<pallas_src>
import jax
import jax.numpy as jnp
from jax.experimental import pallas as pl
from jax.experimental.pallas import tpu as pltpu


def _make_kernel(n_layers: int, use_bf16: bool, emit_ncw: bool, eps: float = 1e-5):
    """Pointwise-conv MLP with InstanceNorm+ReLU between layers (single block)."""

    def kernel(*refs):
        x_ref = refs[0]                       # (Bt, N, 2)      f32
        w_refs = refs[1:1 + n_layers]         # per-layer weights (Cin, Cout)
        b_last_ref = refs[1 + n_layers]       # (1, C_last)     f32
        o_ref = refs[-1]                      # (Bt, F, N) or (Bt, N, F)

        x = x_ref[...]                        # (Bt, N, 2) f32
        bt, n, _ = x.shape

        # ---- layer 0 on the VPU: contraction dim = 2 is MXU-hostile ----------
        w0 = w_refs[0][...]                   # (2, C0) f32
        h = (x[:, :, 0:1] * w0[0:1, :][None, :, :]
             + x[:, :, 1:2] * w0[1:2, :][None, :, :])         # (Bt, N, C0) f32
        # (bias of this conv is cancelled by the following InstanceNorm)

        # ---- layers 1..n-1: IN(affine=False) + ReLU, then Conv1d(k=1) on MXU --
        for i in range(1, n_layers):
            # Two-pass InstanceNorm stats in f32 (numerically safe for
            # large-mean inputs, unlike E[x^2] - mean^2).
            mean = jnp.mean(h, axis=1, keepdims=True)          # (Bt, 1, C)
            hc = h - mean
            var = jnp.mean(hc * hc, axis=1, keepdims=True)     # biased variance
            h = hc * jax.lax.rsqrt(var + eps)
            h = jnp.maximum(h, 0.0)                            # ReLU

            w = w_refs[i][...]                                 # (Cin, Cout), bf16 or f32
            c_in, c_out = w.shape
            # (Bt, N, Cin) -> (Bt*N, Cin): a layout view because N % 8 == 0.
            h2 = h.reshape(bt * n, c_in)
            if use_bf16:
                h2 = h2.astype(jnp.bfloat16)                   # weights pre-cast in wrapper
            acc = jnp.dot(h2, w, preferred_element_type=jnp.float32)
            h = acc.reshape(bt, n, c_out)
            # intermediate biases are dropped (cancelled by the next IN)

        # Only the final conv's bias survives (it is not followed by IN).
        h = h + b_last_ref[...][None, :, :]                    # (Bt, N, C_last)

        if emit_ncw:
            # N is a multiple of 128: NCW stores are lane-dense, transpose on XLU.
            o_ref[...] = jnp.transpose(h, (0, 2, 1)).astype(o_ref.dtype)
        else:
            # Awkward N: emit channels-last; wrapper transposes with XLA.
            o_ref[...] = h.astype(o_ref.dtype)

    return kernel


def _num_tiles(B: int, N: int) -> int:
    """2-way batch split only on 2-TensorCore chips and only if MXU M-dim stays >= 256."""
    two_tc = False
    try:
        kind = jax.devices()[0].device_kind.lower()
        # v7x (2 TC/chip) and v3/v4 megacore; v5e/v6e are single-TC.
        two_tc = ("v7" in kind) or ("v4" in kind) or ("v3" in kind)
    except Exception:
        two_tc = False
    if two_tc and B % 2 == 0 and (B // 2) * N >= 256:
        # TODO(synk): verify on-chip that "parallel" shards grid=(2,) across both
        #             TensorCores; switch to pltpu.CORE_PARALLEL if it does not.
        return 2
    return 1


def keypoint_encoder_forward(kpts, params, *, use_bf16: bool = True):
    """kpts: (B, N, 2) f32.  params: list of (w (Cin,Cout), b (1,Cout)) per conv.

    Returns (B, feature_dim, N) — identical layout to the PyTorch module.
    """
    B, N, cin = kpts.shape
    assert cin == 2
    # Keeps the (Bt,N,C)<->(Bt*N,C) reshapes as layout views and sublane-aligned.
    # TODO(synk): support ragged N via padding + masked InstanceNorm statistics.
    assert N % 8 == 0, "N must be a multiple of 8"
    n_layers = len(params)
    feature_dim = params[-1][0].shape[1]

    num_tiles = _num_tiles(B, N)
    b_tile = B // num_tiles
    emit_ncw = (N % 128 == 0)

    # Pre-cast MXU-layer weights to bf16 in the wrapper (half the DMA/VMEM bytes,
    # no in-kernel casts).  Layer 0 stays f32 (VPU math).  Only the last bias is passed.
    weights = []
    for i, (w, _) in enumerate(params):
        weights.append(w.astype(jnp.bfloat16) if (use_bf16 and i > 0) else w)
    b_last = params[-1][1]

    in_specs = [pl.BlockSpec((b_tile, N, 2), lambda i: (i, 0, 0))]
    for w in weights:
        # Constant index map: DMA'd once, resident across grid steps.
        in_specs.append(pl.BlockSpec(w.shape, lambda i: (0, 0)))
    in_specs.append(pl.BlockSpec(b_last.shape, lambda i: (0, 0)))

    if emit_ncw:
        out_shape = jax.ShapeDtypeStruct((B, feature_dim, N), jnp.float32)
        out_specs = pl.BlockSpec((b_tile, feature_dim, N), lambda i: (i, 0, 0))
    else:
        out_shape = jax.ShapeDtypeStruct((B, N, feature_dim), jnp.float32)
        out_specs = pl.BlockSpec((b_tile, N, feature_dim), lambda i: (i, 0, 0))

    # --- advisory cost estimate (kernel is tiny / latency-bound) --------------
    flops = 0
    transcendentals = 0
    bytes_accessed = kpts.size * 4 + B * feature_dim * N * 4 + b_last.size * 4
    for li, w in enumerate(weights):
        ci, co = w.shape
        flops += 2 * B * N * ci * co
        bytes_accessed += w.size * (2 if w.dtype == jnp.bfloat16 else 4)
        if li < n_layers - 1:
            transcendentals += B * co                 # one rsqrt per (batch, channel)
    cost = pl.CostEstimate(flops=flops, transcendentals=transcendentals,
                           bytes_accessed=bytes_accessed)

    # --- VMEM budget: only raise the scoped limit when actually needed --------
    max_c = max(2, max(w.shape[1] for w in weights))
    interm_bytes = b_tile * N * max_c * 4 * 6                       # h, centered, norm, acc, casts
    io_bytes = 2 * (b_tile * N * 2 * 4) + 2 * (b_tile * N * feature_dim * 4)  # dbl-buffered in/out
    param_bytes = 2 * sum(int(w.size) * (2 if w.dtype == jnp.bfloat16 else 4) for w in weights)
    est = interm_bytes + io_bytes + param_bytes + b_last.size * 8
    cp_kwargs = dict(dimension_semantics=("parallel",))
    if est > 12 * 1024 * 1024:
        # Cap below v7x's 64 MiB physical VMEM; v5e/v6e have 128 MiB physical.
        cp_kwargs["vmem_limit_bytes"] = int(min(est * 3 // 2, 56 * 1024 * 1024))

    out = pl.pallas_call(
        _make_kernel(n_layers, use_bf16, emit_ncw),
        out_shape=out_shape,
        grid=(num_tiles,),
        in_specs=in_specs,
        out_specs=out_specs,
        compiler_params=pltpu.CompilerParams(**cp_kwargs),
        cost_estimate=cost,
    )(kpts, *weights, b_last)

    if not emit_ncw:
        out = jnp.transpose(out, (0, 2, 1))          # (B, N, F) -> (B, F, N)
    return out


def init_params(key, channels):
    """Deterministic Conv1d(k=1) params.  channels = [2] + layers + [feature_dim]."""
    params = []
    n = len(channels)
    for i in range(1, n):
        cin, cout = channels[i - 1], channels[i]
        key, kw, kb = jax.random.split(key, 3)
        bound = 1.0 / jnp.sqrt(float(cin))
        w = jax.random.uniform(kw, (cin, cout), jnp.float32, -bound, bound)
        if i == n - 1:
            b = jnp.zeros((1, cout), jnp.float32)    # nn.init.constant_(last.bias, 0.0)
        else:
            b = jax.random.uniform(kb, (1, cout), jnp.float32, -bound, bound)
        params.append((w, b))
    return params


def reference_forward(kpts, params, eps=1e-5, matmul_dtype=jnp.float32):
    """Pure-JAX reference mirroring the PyTorch forward (biases included)."""
    h = kpts  # (B, N, 2) channels-last == transpose(1,2) + NCW Conv1d(k=1)
    for i, (w, b) in enumerate(params):
        if i == 0:
            h = jnp.einsum("bnc,cd->bnd", h, w) + b[None]
        else:
            mean = jnp.mean(h, axis=1, keepdims=True)
            var = jnp.mean((h - mean) ** 2, axis=1, keepdims=True)
            h = (h - mean) / jnp.sqrt(var + eps)
            h = jnp.maximum(h, 0.0)
            h = jnp.einsum("bnc,cd->bnd",
                           h.astype(matmul_dtype), w.astype(matmul_dtype),
                           preferred_element_type=jnp.float32) + b[None]
    return jnp.transpose(h, (0, 2, 1))  # (B, feature_dim, N)


if __name__ == "__main__":
    B, N = 2, 64
    layers = [32, 64]
    feature_dim = 32
    channels = [2] + layers + [feature_dim]

    key = jax.random.PRNGKey(0)
    key, kx = jax.random.split(key)
    # Unnormalized-looking coords to exercise the two-pass InstanceNorm fix.
    kpts = 100.0 + 30.0 * jax.random.normal(kx, (B, N, 2), jnp.float32)
    params = init_params(key, channels)

    # 1) f32 path: must match the PyTorch-equivalent reference.
    out_f32 = jax.block_until_ready(
        keypoint_encoder_forward(kpts, params, use_bf16=False))
    ref_f32 = reference_forward(kpts, params, matmul_dtype=jnp.float32)
    assert out_f32.shape == (B, feature_dim, N), out_f32.shape
    assert jnp.allclose(out_f32, ref_f32, atol=1e-3, rtol=1e-3), \
        float(jnp.max(jnp.abs(out_f32 - ref_f32)))

    # 2) bf16-MXU fast path (default): compare against the same precision policy.
    out_bf16 = jax.block_until_ready(
        keypoint_encoder_forward(kpts, params, use_bf16=True))
    ref_bf16 = reference_forward(kpts, params, matmul_dtype=jnp.bfloat16)
    assert out_bf16.shape == (B, feature_dim, N), out_bf16.shape
    assert jnp.allclose(out_bf16, ref_bf16, atol=5e-3, rtol=5e-3), \
        float(jnp.max(jnp.abs(out_bf16 - ref_bf16)))

    print("KERNEL_OK")
</pallas_src>

<mosaic_0001>
module attributes {stable_mosaic.version = 11 : i64} {
  func.func @kernel(%arg0: i32, %arg1: memref<2x64x2xf32, #tpu.memory_space<vmem>>, %arg2: memref<2x32xf32, #tpu.memory_space<vmem>>, %arg3: memref<32x64xf32, #tpu.memory_space<vmem>>, %arg4: memref<64x32xf32, #tpu.memory_space<vmem>>, %arg5: memref<1x32xf32, #tpu.memory_space<vmem>>, %arg6: memref<2x64x32xf32, #tpu.memory_space<vmem>>) attributes {dimension_semantics = [#tpu.dimension_semantics<parallel>], iteration_bounds = array<i64: 1>, scalar_prefetch = 0 : i64, scratch_operands = 0 : i64, tpu.core_type = #tpu.core_type<tc>, window_params = [{transform_indices = @transform_0, window_bounds = array<i64: 2, 64, 2>}, {pipeline_mode = #tpu.pipeline_mode<synchronous>, transform_indices = @transform_1, window_bounds = array<i64: 2, 32>}, {pipeline_mode = #tpu.pipeline_mode<synchronous>, transform_indices = @transform_2, window_bounds = array<i64: 32, 64>}, {pipeline_mode = #tpu.pipeline_mode<synchronous>, transform_indices = @transform_3, window_bounds = array<i64: 64, 32>}, {pipeline_mode = #tpu.pipeline_mode<synchronous>, transform_indices = @transform_4, window_bounds = array<i64: 1, 32>}, {transform_indices = @transform_5, window_bounds = array<i64: 2, 64, 32>}]} {
    %c0 = arith.constant 0 : index
    %c0_0 = arith.constant 0 : index
    %c0_1 = arith.constant 0 : index
    %0 = vector.load %arg1[%c0, %c0_0, %c0_1] : memref<2x64x2xf32, #tpu.memory_space<vmem>>, vector<2x64x2xf32>
    %c0_2 = arith.constant 0 : index
    %c0_3 = arith.constant 0 : index
    %1 = vector.load %arg2[%c0_2, %c0_3] : memref<2x32xf32, #tpu.memory_space<vmem>>, vector<2x32xf32>
    %2 = vector.extract_strided_slice %0 {offsets = [0, 0, 0], sizes = [2, 64, 1], strides = [1, 1, 1]} : vector<2x64x2xf32> to vector<2x64x1xf32>
    %3 = vector.extract_strided_slice %1 {offsets = [0, 0], sizes = [1, 32], strides = [1, 1]} : vector<2x32xf32> to vector<1x32xf32>
    %4 = vector.shape_cast %3 : vector<1x32xf32> to vector<1x1x32xf32>
    %5 = vector.broadcast %2 : vector<2x64x1xf32> to vector<2x64x32xf32>
    %6 = vector.broadcast %4 : vector<1x1x32xf32> to vector<2x64x32xf32>
    %7 = arith.mulf %5, %6 : vector<2x64x32xf32>
    %8 = vector.extract_strided_slice %0 {offsets = [0, 0, 1], sizes = [2, 64, 1], strides = [1, 1, 1]} : vector<2x64x2xf32> to vector<2x64x1xf32>
    %9 = vector.extract_strided_slice %1 {offsets = [1, 0], sizes = [1, 32], strides = [1, 1]} : vector<2x32xf32> to vector<1x32xf32>
    %10 = vector.shape_cast %9 : vector<1x32xf32> to vector<1x1x32xf32>
    %11 = vector.broadcast %8 : vector<2x64x1xf32> to vector<2x64x32xf32>
    %12 = vector.broadcast %10 : vector<1x1x32xf32> to vector<2x64x32xf32>
    %13 = arith.mulf %11, %12 : vector<2x64x32xf32>
    %14 = arith.addf %7, %13 : vector<2x64x32xf32>
    %cst = arith.constant dense<0.000000e+00> : vector<2x32xf32>
    %15 = vector.multi_reduction <add>, %14, %cst [1] : vector<2x64x32xf32> to vector<2x32xf32>
    %16 = vector.shape_cast %15 : vector<2x32xf32> to vector<2x1x32xf32>
    %cst_4 = arith.constant 6.400000e+01 : f32
    %17 = vector.broadcast %cst_4 : f32 to vector<2x1x32xf32>
    %18 = arith.divf %16, %17 : vector<2x1x32xf32>
    %19 = vector.broadcast %18 : vector<2x1x32xf32> to vector<2x64x32xf32>
    %20 = arith.subf %14, %19 : vector<2x64x32xf32>
    %21 = arith.mulf %20, %20 : vector<2x64x32xf32>
    %cst_5 = arith.constant dense<0.000000e+00> : vector<2x32xf32>
    %22 = vector.multi_reduction <add>, %21, %cst_5 [1] : vector<2x64x32xf32> to vector<2x32xf32>
    %23 = vector.shape_cast %22 : vector<2x32xf32> to vector<2x1x32xf32>
    %cst_6 = arith.constant 6.400000e+01 : f32
    %24 = vector.broadcast %cst_6 : f32 to vector<2x1x32xf32>
    %25 = arith.divf %23, %24 : vector<2x1x32xf32>
    %cst_7 = arith.constant 9.99999974E-6 : f32
    %26 = vector.broadcast %cst_7 : f32 to vector<2x1x32xf32>
    %27 = arith.addf %25, %26 : vector<2x1x32xf32>
    %28 = math.rsqrt %27 : vector<2x1x32xf32>
    %29 = vector.broadcast %28 : vector<2x1x32xf32> to vector<2x64x32xf32>
    %30 = arith.mulf %20, %29 : vector<2x64x32xf32>
    %cst_8 = arith.constant 0.000000e+00 : f32
    %31 = vector.broadcast %cst_8 : f32 to vector<2x64x32xf32>
    %32 = arith.maximumf %30, %31 : vector<2x64x32xf32>
    %c0_9 = arith.constant 0 : index
    %c0_10 = arith.constant 0 : index
    %33 = vector.load %arg3[%c0_9, %c0_10] : memref<32x64xf32, #tpu.memory_space<vmem>>, vector<32x64xf32>
    %34 = vector.shape_cast %32 : vector<2x64x32xf32> to vector<128x32xf32>
    %cst_11 = arith.constant dense<0.000000e+00> : vector<128x64xf32>
    %35 = tpu.matmul %34, %33, %cst_11 {dimension_numbers = #tpu.dot_dimension_numbers<[1], [0], [0], [1], [0, 0, 1, 1], [], []>} : vector<128x32xf32>, vector<32x64xf32>, vector<128x64xf32> -> vector<128x64xf32>
    %36 = vector.shape_cast %35 : vector<128x64xf32> to vector<2x64x64xf32>
    %cst_12 = arith.constant dense<0.000000e+00> : vector<2x64xf32>
    %37 = vector.multi_reduction <add>, %36, %cst_12 [1] : vector<2x64x64xf32> to vector<2x64xf32>
    %38 = vector.shape_cast %37 : vector<2x64xf32> to vector<2x1x64xf32>
    %cst_13 = arith.constant 6.400000e+01 : f32
    %39 = vector.broadcast %cst_13 : f32 to vector<2x1x64xf32>
    %40 = arith.divf %38, %39 : vector<2x1x64xf32>
    %41 = vector.broadcast %40 : vector<2x1x64xf32> to vector<2x64x64xf32>
    %42 = arith.subf %36, %41 : vector<2x64x64xf32>
    %43 = arith.mulf %42, %42 : vector<2x64x64xf32>
    %cst_14 = arith.constant dense<0.000000e+00> : vector<2x64xf32>
    %44 = vector.multi_reduction <add>, %43, %cst_14 [1] : vector<2x64x64xf32> to vector<2x64xf32>
    %45 = vector.shape_cast %44 : vector<2x64xf32> to vector<2x1x64xf32>
    %cst_15 = arith.constant 6.400000e+01 : f32
    %46 = vector.broadcast %cst_15 : f32 to vector<2x1x64xf32>
    %47 = arith.divf %45, %46 : vector<2x1x64xf32>
    %cst_16 = arith.constant 9.99999974E-6 : f32
    %48 = vector.broadcast %cst_16 : f32 to vector<2x1x64xf32>
    %49 = arith.addf %47, %48 : vector<2x1x64xf32>
    %50 = math.rsqrt %49 : vector<2x1x64xf32>
    %51 = vector.broadcast %50 : vector<2x1x64xf32> to vector<2x64x64xf32>
    %52 = arith.mulf %42, %51 : vector<2x64x64xf32>
    %cst_17 = arith.constant 0.000000e+00 : f32
    %53 = vector.broadcast %cst_17 : f32 to vector<2x64x64xf32>
    %54 = arith.maximumf %52, %53 : vector<2x64x64xf32>
    %c0_18 = arith.constant 0 : index
    %c0_19 = arith.constant 0 : index
    %55 = vector.load %arg4[%c0_18, %c0_19] : memref<64x32xf32, #tpu.memory_space<vmem>>, vector<64x32xf32>
    %56 = vector.shape_cast %54 : vector<2x64x64xf32> to vector<128x64xf32>
    %cst_20 = arith.constant dense<0.000000e+00> : vector<128x32xf32>
    %57 = tpu.matmul %56, %55, %cst_20 {dimension_numbers = #tpu.dot_dimension_numbers<[1], [0], [0], [1], [0, 0, 1, 1], [], []>} : vector<128x64xf32>, vector<64x32xf32>, vector<128x32xf32> -> vector<128x32xf32>
    %58 = vector.shape_cast %57 : vector<128x32xf32> to vector<2x64x32xf32>
    %c0_21 = arith.constant 0 : index
    %c0_22 = arith.constant 0 : index
    %59 = vector.load %arg5[%c0_21, %c0_22] : memref<1x32xf32, #tpu.memory_space<vmem>>, vector<1x32xf32>
    %60 = vector.shape_cast %59 : vector<1x32xf32> to vector<1x1x32xf32>
    %61 = vector.broadcast %60 : vector<1x1x32xf32> to vector<2x64x32xf32>
    %62 = arith.addf %58, %61 : vector<2x64x32xf32>
    %c0_23 = arith.constant 0 : index
    %c0_24 = arith.constant 0 : index
    %c0_25 = arith.constant 0 : index
    %63 = vector.load %arg6[%c0_23, %c0_24, %c0_25] : memref<2x64x32xf32, #tpu.memory_space<vmem>>, vector<2x64x32xf32>
    tpu.vector_store %arg6[%c0_23, %c0_24, %c0_25], %62 {strides = array<i32>} : memref<2x64x32xf32, #tpu.memory_space<vmem>>, vector<2x64x32xf32>,
    return
  }
  func.func @transform_0(%arg0: i32) -> (i32, i32, i32) {
    %c0_i32 = arith.constant 0 : i32
    %c0_i32_0 = arith.constant 0 : i32
    %c0_i32_1 = arith.constant 0 : i32
    return %arg0, %c0_i32, %c0_i32_0 : i32, i32, i32
  }
  func.func @transform_1(%arg0: i32) -> (i32, i32) {
    %c0_i32 = arith.constant 0 : i32
    %c0_i32_0 = arith.constant 0 : i32
    %c0_i32_1 = arith.constant 0 : i32
    return %c0_i32, %c0_i32_0 : i32, i32
  }
  func.func @transform_2(%arg0: i32) -> (i32, i32) {
    %c0_i32 = arith.constant 0 : i32
    %c0_i32_0 = arith.constant 0 : i32
    %c0_i32_1 = arith.constant 0 : i32
    return %c0_i32, %c0_i32_0 : i32, i32
  }
  func.func @transform_3(%arg0: i32) -> (i32, i32) {
    %c0_i32 = arith.constant 0 : i32
    %c0_i32_0 = arith.constant 0 : i32
    %c0_i32_1 = arith.constant 0 : i32
    return %c0_i32, %c0_i32_0 : i32, i32
  }
  func.func @transform_4(%arg0: i32) -> (i32, i32) {
    %c0_i32 = arith.constant 0 : i32
    %c0_i32_0 = arith.constant 0 : i32
    %c0_i32_1 = arith.constant 0 : i32
    return %c0_i32, %c0_i32_0 : i32, i32
  }
  func.func @transform_5(%arg0: i32) -> (i32, i32, i32) {
    %c0_i32 = arith.constant 0 : i32
    %c0_i32_0 = arith.constant 0 : i32
    %c0_i32_1 = arith.constant 0 : i32
    return %arg0, %c0_i32, %c0_i32_0 : i32, i32, i32
  }
}

</mosaic_0001>

<llo_original>
// kernel: tpu_custom_call.1
$region0: #{tpu_custom_call.1}
  #allocation0 [shape = 'u32[]', space=smem, size = 0x4, offset = 0x4, fixed_abs, tag = 'smem constant byte address 0x4 - core index']
  #allocation1 [shape = 'u32[72,128]{1,0:T(1,128)}', space=vmem, size = 0x9000, scoped, tag = 'internal scratch']
  %s0 = inlined_call_operand.vmem [shape: f32[2,64,2], index: 0, kind: input, shape index: {}]
  %s1 = inlined_call_operand.vmem [shape: f32[2,32], index: 1, kind: input, shape index: {}]
  %s2 = inlined_call_operand.vmem [shape: f32[32,64], index: 2, kind: input, shape index: {}]
  %s3 = inlined_call_operand.vmem [shape: f32[64,32], index: 3, kind: input, shape index: {}]
  %s4 = inlined_call_operand.vmem [shape: f32[1,32], index: 4, kind: input, shape index: {}]
  %s5 = inlined_call_operand.vmem [shape: f32[2,64,32], index: 5, kind: output, shape index: {}]
  %s6 = sld [smem:[#allocation0]]
  $region30: #{tpu_custom_call.1} parent=0
    _
  %s8 = ssub.s32 1, %s6
  %s9 = scalar_select 0, %s8, %s6
  // Predicated region
  $region2: #{tpu_custom_call.1} parent=0 // pred_check
    _
  $region3: #{tpu_custom_call.1} parent=0 // pred_check_branch
    %11 = sbr.rel (0) target = $region5
  $region4: #{tpu_custom_call.1} parent=0 // pred_region
    _
  $region5: #{tpu_custom_call.1} parent=0 // pred_fallthru
    _
  // Predicated region
  $region6: #{tpu_custom_call.1} parent=0 // pred_check
    _
  $region7: #{tpu_custom_call.1} parent=0 // pred_check_branch
    %13 = sbr.rel (0) target = $region9
  $region8: #{tpu_custom_call.1} parent=0 // pred_region
    _
  $region9: #{tpu_custom_call.1} parent=0 // pred_fallthru
    _
  // Predicated region
  $region10: #{tpu_custom_call.1} parent=0 // pred_check
    _
  $region11: #{tpu_custom_call.1} parent=0 // pred_check_branch
    %15 = sbr.rel (0) target = $region13
  $region12: #{tpu_custom_call.1} parent=0 // pred_region
    _
  $region13: #{tpu_custom_call.1} parent=0 // pred_fallthru
    _
  // Predicated region
  $region14: #{tpu_custom_call.1} parent=0 // pred_check
    _
  $region15: #{tpu_custom_call.1} parent=0 // pred_check_branch
    %17 = sbr.rel (0) target = $region17
  $region16: #{tpu_custom_call.1} parent=0 // pred_region
    _
  $region17: #{tpu_custom_call.1} parent=0 // pred_fallthru
    _
  // Predicated region
  $region18: #{tpu_custom_call.1} parent=0 // pred_check
    _
  $region19: #{tpu_custom_call.1} parent=0 // pred_check_branch
    %19 = sbr.rel (0) target = $region21
  $region20: #{tpu_custom_call.1} parent=0 // pred_region
    _
  $region21: #{tpu_custom_call.1} parent=0 // pred_fallthru
    _
  %v20 = vld [vmem:[%s0] sm:$0xff]
  %v21 = vld [vmem:[%s0 + $0x8] sm:$0xff]
  %v22 = vld [vmem:[%s0 + $0x10] sm:$0xff]
  %v23 = vld [vmem:[%s0 + $0x18] sm:$0xff]
  %v24 = vld [vmem:[%s0 + $0x20] sm:$0xff]
  %v25 = vld [vmem:[%s0 + $0x28] sm:$0xff]
  %v26 = vld [vmem:[%s0 + $0x30] sm:$0xff]
  %v27 = vld [vmem:[%s0 + $0x38] sm:$0xff]
  %v28 = vld [vmem:[%s0 + $0x40] sm:$0xff]
  %v29 = vld [vmem:[%s0 + $0x48] sm:$0xff]
  %v30 = vld [vmem:[%s0 + $0x50] sm:$0xff]
  %v31 = vld [vmem:[%s0 + $0x58] sm:$0xff]
  %v32 = vld [vmem:[%s0 + $0x60] sm:$0xff]
  %v33 = vld [vmem:[%s0 + $0x68] sm:$0xff]
  %v34 = vld [vmem:[%s0 + $0x70] sm:$0xff]
  %v35 = vld [vmem:[%s0 + $0x78] sm:$0xff]
  %v36 = vld [vmem:[%s1] sm:$0x3]
  %38 = vset.pattern.permute.xlu0 0
  %39 = vperm.xlu0 %38, %v20
  %v40 = vpop.permute.xlu0 %39
  %43 = vset.pattern.permute.xlu0 0
  %44 = vperm.xlu0 %43, %v21
  %v45 = vpop.permute.xlu0 %44
  %48 = vset.pattern.permute.xlu0 0
  %49 = vperm.xlu0 %48, %v22
  %v50 = vpop.permute.xlu0 %49
  %53 = vset.pattern.permute.xlu0 0
  %54 = vperm.xlu0 %53, %v23
  %v55 = vpop.permute.xlu0 %54
  %58 = vset.pattern.permute.xlu0 0
  %59 = vperm.xlu0 %58, %v24
  %v60 = vpop.permute.xlu0 %59
  %63 = vset.pattern.permute.xlu0 0
  %64 = vperm.xlu0 %63, %v25
  %v65 = vpop.permute.xlu0 %64
  %68 = vset.pattern.permute.xlu0 0
  %69 = vperm.xlu0 %68, %v26
  %v70 = vpop.permute.xlu0 %69
  %73 = vset.pattern.permute.xlu0 0
  %74 = vperm.xlu0 %73, %v27
  %v75 = vpop.permute.xlu0 %74
  %78 = vset.pattern.permute.xlu0 0
  %79 = vperm.xlu0 %78, %v28
  %v80 = vpop.permute.xlu0 %79
  %83 = vset.pattern.permute.xlu0 0
  %84 = vperm.xlu0 %83, %v29
  %v85 = vpop.permute.xlu0 %84
  %88 = vset.pattern.permute.xlu0 0
  %89 = vperm.xlu0 %88, %v30
  %v90 = vpop.permute.xlu0 %89
  %93 = vset.pattern.permute.xlu0 0
  %94 = vperm.xlu0 %93, %v31
  %v95 = vpop.permute.xlu0 %94
  %98 = vset.pattern.permute.xlu0 0
  %99 = vperm.xlu0 %98, %v32
  %v100 = vpop.permute.xlu0 %99
  %103 = vset.pattern.permute.xlu0 0
  %104 = vperm.xlu0 %103, %v33
  %v105 = vpop.permute.xlu0 %104
  %108 = vset.pattern.permute.xlu0 0
  %109 = vperm.xlu0 %108, %v34
  %v110 = vpop.permute.xlu0 %109
  %113 = vset.pattern.permute.xlu0 0
  %114 = vperm.xlu0 %113, %v35
  %v115 = vpop.permute.xlu0 %114
  %v117 = vperm.slane %v36, 0
  %v118 = vmul.f32 %v40, %v117
  %v119 = vmul.f32 %v45, %v117
  %v120 = vmul.f32 %v50, %v117
  %v121 = vmul.f32 %v55, %v117
  %v122 = vmul.f32 %v60, %v117
  %v123 = vmul.f32 %v65, %v117
  %v124 = vmul.f32 %v70, %v117
  %v125 = vmul.f32 %v75, %v117
  %v126 = vmul.f32 %v80, %v117
  %v127 = vmul.f32 %v85, %v117
  %v128 = vmul.f32 %v90, %v117
  %v129 = vmul.f32 %v95, %v117
  %v130 = vmul.f32 %v100, %v117
  %v131 = vmul.f32 %v105, %v117
  %v132 = vmul.f32 %v110, %v117
  %v133 = vmul.f32 %v115, %v117
  %134 = vset.pattern.permute.xlu0 1
  %135 = vperm.xlu0 %134, %v20
  %v136 = vpop.permute.xlu0 %135
  %138 = vset.pattern.permute.xlu0 1
  %139 = vperm.xlu0 %138, %v21
  %v140 = vpop.permute.xlu0 %139
  %142 = vset.pattern.permute.xlu0 1
  %143 = vperm.xlu0 %142, %v22
  %v144 = vpop.permute.xlu0 %143
  %146 = vset.pattern.permute.xlu0 1
  %147 = vperm.xlu0 %146, %v23
  %v148 = vpop.permute.xlu0 %147
  %150 = vset.pattern.permute.xlu0 1
  %151 = vperm.xlu0 %150, %v24
  %v152 = vpop.permute.xlu0 %151
  %154 = vset.pattern.permute.xlu0 1
  %155 = vperm.xlu0 %154, %v25
  %v156 = vpop.permute.xlu0 %155
  %158 = vset.pattern.permute.xlu0 1
  %159 = vperm.xlu0 %158, %v26
  %v160 = vpop.permute.xlu0 %159
  %162 = vset.pattern.permute.xlu0 1
  %163 = vperm.xlu0 %162, %v27
  %v164 = vpop.permute.xlu0 %163
  %166 = vset.pattern.permute.xlu0 1
  %167 = vperm.xlu0 %166, %v28
  %v168 = vpop.permute.xlu0 %167
  %170 = vset.pattern.permute.xlu0 1
  %171 = vperm.xlu0 %170, %v29
  %v172 = vpop.permute.xlu0 %171
  %174 = vset.pattern.permute.xlu0 1
  %175 = vperm.xlu0 %174, %v30
  %v176 = vpop.permute.xlu0 %175
  %178 = vset.pattern.permute.xlu0 1
  %179 = vperm.xlu0 %178, %v31
  %v180 = vpop.permute.xlu0 %179
  %182 = vset.pattern.permute.xlu0 1
  %183 = vperm.xlu0 %182, %v32
  %v184 = vpop.permute.xlu0 %183
  %186 = vset.pattern.permute.xlu0 1
  %187 = vperm.xlu0 %186, %v33
  %v188 = vpop.permute.xlu0 %187
  %190 = vset.pattern.permute.xlu0 1
  %191 = vperm.xlu0 %190, %v34
  %v192 = vpop.permute.xlu0 %191
  %194 = vset.pattern.permute.xlu0 1
  %195 = vperm.xlu0 %194, %v35
  %v196 = vpop.permute.xlu0 %195
  %v198 = vperm.slane %v36, 1
  %v199 = vmul.f32 %v136, %v198
  %v200 = vmul.f32 %v140, %v198
  %v201 = vmul.f32 %v144, %v198
  %v202 = vmul.f32 %v148, %v198
  %v203 = vmul.f32 %v152, %v198
  %v204 = vmul.f32 %v156, %v198
  %v205 = vmul.f32 %v160, %v198
  %v206 = vmul.f32 %v164, %v198
  %v207 = vmul.f32 %v168, %v198
  %v208 = vmul.f32 %v172, %v198
  %v209 = vmul.f32 %v176, %v198
  %v210 = vmul.f32 %v180, %v198
  %v211 = vmul.f32 %v184, %v198
  %v212 = vmul.f32 %v188, %v198
  %v213 = vmul.f32 %v192, %v198
  %v214 = vmul.f32 %v196, %v198
  %v215 = vadd.f32 %v118, %v199
  %v216 = vadd.f32 %v119, %v200
  %v217 = vadd.f32 %v120, %v201
  %v218 = vadd.f32 %v121, %v202
  %v219 = vadd.f32 %v122, %v203
  %v220 = vadd.f32 %v123, %v204
  %v221 = vadd.f32 %v124, %v205
  %v222 = vadd.f32 %v125, %v206
  %v223 = vadd.f32 %v126, %v207
  %v224 = vadd.f32 %v127, %v208
  %v225 = vadd.f32 %v128, %v209
  %v226 = vadd.f32 %v129, %v210
  %v227 = vadd.f32 %v130, %v211
  %v228 = vadd.f32 %v131, %v212
  %v229 = vadd.f32 %v132, %v213
  %v230 = vadd.f32 %v133, %v214
  %vm231 = vcmask 261120
  %v232 = vsel %vm231, %v215, 0.0
  %v233 = vsel %vm231, %v216, 0.0
  %v234 = vadd.f32 %v232, %v233
  %v235 = vsel %vm231, %v217, 0.0
  %v236 = vadd.f32 %v234, %v235
  %v237 = vsel %vm231, %v218, 0.0
  %v238 = vadd.f32 %v236, %v237
  %v239 = vsel %vm231, %v219, 0.0
  %v240 = vadd.f32 %v238, %v239
  %v241 = vsel %vm231, %v220, 0.0
  %v242 = vadd.f32 %v240, %v241
  %v243 = vsel %vm231, %v221, 0.0
  %v244 = vadd.f32 %v242, %v243
  %v245 = vsel %vm231, %v222, 0.0
  %v246 = vadd.f32 %v244, %v245
  %v247 = vrot.slane %v246, 4
  %v248 = vadd.f32 %v246, %v247
  %v249 = vrot.slane %v248, 2
  %v250 = vadd.f32 %v248, %v249
  %v251 = vrot.slane %v250, 1
  %v252 = vadd.f32 %v250, %v251
  %v253 = vsel %vm231, %v223, 0.0
  %v254 = vsel %vm231, %v224, 0.0
  %v255 = vadd.f32 %v253, %v254
  %v256 = vsel %vm231, %v225, 0.0
  %v257 = vadd.f32 %v255, %v256
  %v258 = vsel %vm231, %v226, 0.0
  %v259 = vadd.f32 %v257, %v258
  %v260 = vsel %vm231, %v227, 0.0
  %v261 = vadd.f32 %v259, %v260
  %v262 = vsel %vm231, %v228, 0.0
  %v263 = vadd.f32 %v261, %v262
  %v264 = vsel %vm231, %v229, 0.0
  %v265 = vadd.f32 %v263, %v264
  %v266 = vsel %vm231, %v230, 0.0
  %v267 = vadd.f32 %v265, %v266
  %v268 = vrot.slane %v267, 4
  %v269 = vadd.f32 %v267, %v268
  %v270 = vrot.slane %v269, 2
  %v271 = vadd.f32 %v269, %v270
  %v272 = vrot.slane %v271, 1
  %v273 = vadd.f32 %v271, %v272
  %v274 = vrcp.pop 64.0
  %v275 = vmul.f32 64.0, %v274
  %v276 = vsub.f32 1.0, %v275
  %v277 = vmul.f32 %v274, %v276
  %v278 = vadd.f32 %v274, %v277
  %vm279 = vweird.f32 %v274
  %v280 = vsel %vm279, %v274, %v278
  %v281 = vmul.f32 %v252, %v280
  %v282 = vmul.f32 %v273, %v280
  %v283 = vsub.f32 %v215, %v281
  %v284 = vsub.f32 %v216, %v281
  %v285 = vsub.f32 %v217, %v281
  %v286 = vsub.f32 %v218, %v281
  %v287 = vsub.f32 %v219, %v281
  %v288 = vsub.f32 %v220, %v281
  %v289 = vsub.f32 %v221, %v281
  %v290 = vsub.f32 %v222, %v281
  %v291 = vsub.f32 %v223, %v282
  %v292 = vsub.f32 %v224, %v282
  %v293 = vsub.f32 %v225, %v282
  %v294 = vsub.f32 %v226, %v282
  %v295 = vsub.f32 %v227, %v282
  %v296 = vsub.f32 %v228, %v282
  %v297 = vsub.f32 %v229, %v282
  %v298 = vsub.f32 %v230, %v282
  %v299 = vmul.f32 %v283, %v283
  %v300 = vmul.f32 %v284, %v284
  %v301 = vmul.f32 %v285, %v285
  %v302 = vmul.f32 %v286, %v286
  %v303 = vmul.f32 %v287, %v287
  %v304 = vmul.f32 %v288, %v288
  %v305 = vmul.f32 %v289, %v289
  %v306 = vmul.f32 %v290, %v290
  %v307 = vmul.f32 %v291, %v291
  %v308 = vmul.f32 %v292, %v292
  %v309 = vmul.f32 %v293, %v293
  %v310 = vmul.f32 %v294, %v294
  %v311 = vmul.f32 %v295, %v295
  %v312 = vmul.f32 %v296, %v296
  %v313 = vmul.f32 %v297, %v297
  %v314 = vmul.f32 %v298, %v298
  %v315 = vsel %vm231, %v299, 0.0
  %v316 = vsel %vm231, %v300, 0.0
  %v317 = vadd.f32 %v315, %v316
  %v318 = vsel %vm231, %v301, 0.0
  %v319 = vadd.f32 %v317, %v318
  %v320 = vsel %vm231, %v302, 0.0
  %v321 = vadd.f32 %v319, %v320
  %v322 = vsel %vm231, %v303, 0.0
  %v323 = vadd.f32 %v321, %v322
  %v324 = vsel %vm231, %v304, 0.0
  %v325 = vadd.f32 %v323, %v324
  %v326 = vsel %vm231, %v305, 0.0
  %v327 = vadd.f32 %v325, %v326
  %v328 = vsel %vm231, %v306, 0.0
  %v329 = vadd.f32 %v327, %v328
  %v330 = vrot.slane %v329, 4
  %v331 = vadd.f32 %v329, %v330
  %v332 = vrot.slane %v331, 2
  %v333 = vadd.f32 %v331, %v332
  %v334 = vrot.slane %v333, 1
  %v335 = vadd.f32 %v333, %v334
  %v336 = vsel %vm231, %v307, 0.0
  %v337 = vsel %vm231, %v308, 0.0
  %v338 = vadd.f32 %v336, %v337
  %v339 = vsel %vm231, %v309, 0.0
  %v340 = vadd.f32 %v338, %v339
  %v341 = vsel %vm231, %v310, 0.0
  %v342 = vadd.f32 %v340, %v341
  %v343 = vsel %vm231, %v311, 0.0
  %v344 = vadd.f32 %v342, %v343
  %v345 = vsel %vm231, %v312, 0.0
  %v346 = vadd.f32 %v344, %v345
  %v347 = vsel %vm231, %v313, 0.0
  %v348 = vadd.f32 %v346, %v347
  %v349 = vsel %vm231, %v314, 0.0
  %v350 = vadd.f32 %v348, %v349
  %v351 = vrot.slane %v350, 4
  %v352 = vadd.f32 %v350, %v351
  %v353 = vrot.slane %v352, 2
  %v354 = vadd.f32 %v352, %v353
  %v355 = vrot.slane %v354, 1
  %v356 = vadd.f32 %v354, %v355
  %v357 = vmul.f32 %v335, %v280
  %v358 = vmul.f32 %v356, %v280
  %v359 = vadd.f32 %v357, 1e-05
  %v360 = vadd.f32 %v358, 1e-05
  %v361 = vrsqrt.pop %v359
  %v362 = vmul.f32 %v361, %v359
  %v363 = vmul.f32 %v362, %v361
  %v364 = vmul.f32 0.5, %v363
  %v365 = vsub.f32 1.5, %v364
  %v366 = vmul.f32 %v361, %v365
  %vm367 = vweird.f32 %v359
  %vm368 = vweird.f32 %v361
  %vm369 = vmor %vm367, %vm368
  %v370 = vsel %vm369, %v361, %v366
  %v371 = vrsqrt.pop %v360
  %v372 = vmul.f32 %v371, %v360
  %v373 = vmul.f32 %v372, %v371
  %v374 = vmul.f32 0.5, %v373
  %v375 = vsub.f32 1.5, %v374
  %v376 = vmul.f32 %v371, %v375
  %vm377 = vweird.f32 %v360
  %vm378 = vweird.f32 %v371
  %vm379 = vmor %vm377, %vm378
  %v380 = vsel %vm379, %v371, %v376
  %v381 = vmul.f32 %v283, %v370
  %v382 = vmul.f32 %v284, %v370
  %v383 = vmul.f32 %v285, %v370
  %v384 = vmul.f32 %v286, %v370
  %v385 = vmul.f32 %v287, %v370
  %v386 = vmul.f32 %v288, %v370
  %v387 = vmul.f32 %v289, %v370
  %v388 = vmul.f32 %v290, %v370
  %v389 = vmul.f32 %v291, %v380
  %v390 = vmul.f32 %v292, %v380
  %v391 = vmul.f32 %v293, %v380
  %v392 = vmul.f32 %v294, %v380
  %v393 = vmul.f32 %v295, %v380
  %v394 = vmul.f32 %v296, %v380
  %v395 = vmul.f32 %v297, %v380
  %v396 = vmul.f32 %v298, %v380
  %v397 = vmax.f32 %v381, 0.0
  %v398 = vmax.f32 %v382, 0.0
  %v399 = vmax.f32 %v383, 0.0
  %v400 = vmax.f32 %v384, 0.0
  %v401 = vmax.f32 %v385, 0.0
  %v402 = vmax.f32 %v386, 0.0
  %v403 = vmax.f32 %v387, 0.0
  %v404 = vmax.f32 %v388, 0.0
  %v405 = vmax.f32 %v389, 0.0
  %v406 = vmax.f32 %v390, 0.0
  %v407 = vmax.f32 %v391, 0.0
  %v408 = vmax.f32 %v392, 0.0
  %v409 = vmax.f32 %v393, 0.0
  %v410 = vmax.f32 %v394, 0.0
  %v411 = vmax.f32 %v395, 0.0
  %v412 = vmax.f32 %v396, 0.0
  %v413 = vld [vmem:[%s2] sm:$0xff]
  %v414 = vld [vmem:[%s2 + $0x8] sm:$0xff]
  %v415 = vld [vmem:[%s2 + $0x10] sm:$0xff]
  %v416 = vld [vmem:[%s2 + $0x18] sm:$0xff]
  %v418 = vsel %vm231, %v397, 0
  %v421 = vsel %vm231, %v398, 0
  %v424 = vsel %vm231, %v399, 0
  %v427 = vsel %vm231, %v400, 0
  %v430 = vsel %vm231, %v401, 0
  %v433 = vsel %vm231, %v402, 0
  %v436 = vsel %vm231, %v403, 0
  %v439 = vsel %vm231, %v404, 0
  %v442 = vsel %vm231, %v405, 0
  %v445 = vsel %vm231, %v406, 0
  %v448 = vsel %vm231, %v407, 0
  %v451 = vsel %vm231, %v408, 0
  %v454 = vsel %vm231, %v409, 0
  %v457 = vsel %vm231, %v410, 0
  %v460 = vsel %vm231, %v411, 0
  %v463 = vsel %vm231, %v412, 0
  %465 = vmatpush.msra.mxu0 0.0
  %466 = vmatpush.msra.mxu0 0.0
  %467 = vmatpush.msra.mxu0 0.0
  %468 = vmatpush.msra.mxu0 0.0
  %469 = vmatpush.msra.mxu0 0.0
  %470 = vmatpush.msra.mxu0 0.0
  %471 = vmatpush.msra.mxu0 0.0
  %472 = vmatpush.msra.mxu0 0.0
  %473 = vmatpush.msra.mxu0 0.0
  %474 = vmatpush.msra.mxu0 0.0
  %475 = vmatpush.msra.mxu0 0.0
  %476 = vmatpush.msra.mxu0 0.0
  %477 = vmatpush.msra.mxu0 %v416
  %478 = vmatpush.msra.mxu0 %v415
  %479 = vmatpush.msra.mxu0 %v414
  %480 = vmatpush.msra.mxu0 %v413
  %481 = vmatmul.f32.gmra.mxu0 %v418
  %v482 = vpop.f32.mrf.mxu0
  %v483 = vadd.f32 0.0, %v482
  %484 = vmatmul.f32.gmra.mxu0 %v421
  %v485 = vpop.f32.mrf.mxu0
  %v486 = vadd.f32 0.0, %v485
  %487 = vmatmul.f32.gmra.mxu0 %v424
  %v488 = vpop.f32.mrf.mxu0
  %v489 = vadd.f32 0.0, %v488
  %490 = vmatmul.f32.gmra.mxu0 %v427
  %v491 = vpop.f32.mrf.mxu0
  %v492 = vadd.f32 0.0, %v491
  %493 = vmatmul.f32.gmra.mxu0 %v430
  %v494 = vpop.f32.mrf.mxu0
  %v495 = vadd.f32 0.0, %v494
  %496 = vmatmul.f32.gmra.mxu0 %v433
  %v497 = vpop.f32.mrf.mxu0
  %v498 = vadd.f32 0.0, %v497
  %499 = vmatmul.f32.gmra.mxu0 %v436
  %v500 = vpop.f32.mrf.mxu0
  %v501 = vadd.f32 0.0, %v500
  %502 = vmatmul.f32.gmra.mxu0 %v439
  %v503 = vpop.f32.mrf.mxu0
  %v504 = vadd.f32 0.0, %v503
  %505 = vmatmul.f32.gmra.mxu0 %v442
  %v506 = vpop.f32.mrf.mxu0
  %v507 = vadd.f32 0.0, %v506
  %508 = vmatmul.f32.gmra.mxu0 %v445
  %v509 = vpop.f32.mrf.mxu0
  %v510 = vadd.f32 0.0, %v509
  %511 = vmatmul.f32.gmra.mxu0 %v448
  %v512 = vpop.f32.mrf.mxu0
  %v513 = vadd.f32 0.0, %v512
  %514 = vmatmul.f32.gmra.mxu0 %v451
  %v515 = vpop.f32.mrf.mxu0
  %v516 = vadd.f32 0.0, %v515
  %517 = vmatmul.f32.gmra.mxu0 %v454
  %v518 = vpop.f32.mrf.mxu0
  %v519 = vadd.f32 0.0, %v518
  %520 = vmatmul.f32.gmra.mxu0 %v457
  %v521 = vpop.f32.mrf.mxu0
  %v522 = vadd.f32 0.0, %v521
  %523 = vmatmul.f32.gmra.mxu0 %v460
  %v524 = vpop.f32.mrf.mxu0
  %v525 = vadd.f32 0.0, %v524
  %526 = vmatmul.f32.gmra.mxu0 %v463
  %v527 = vpop.f32.mrf.mxu0
  %v528 = vadd.f32 0.0, %v527
  %529 = vdwg.mxu0
  %vm530 = vcmask 523264
  %v531 = vsel %vm530, %v483, 0.0
  %v532 = vsel %vm530, %v486, 0.0
  %v533 = vadd.f32 %v531, %v532
  %v534 = vsel %vm530, %v489, 0.0
  %v535 = vadd.f32 %v533, %v534
  %v536 = vsel %vm530, %v492, 0.0
  %v537 = vadd.f32 %v535, %v536
  %v538 = vsel %vm530, %v495, 0.0
  %v539 = vadd.f32 %v537, %v538
  %v540 = vsel %vm530, %v498, 0.0
  %v541 = vadd.f32 %v539, %v540
  %v542 = vsel %vm530, %v501, 0.0
  %v543 = vadd.f32 %v541, %v542
  %v544 = vsel %vm530, %v504, 0.0
  %v545 = vadd.f32 %v543, %v544
  %v546 = vrot.slane %v545, 4
  %v547 = vadd.f32 %v545, %v546
  %v548 = vrot.slane %v547, 2
  %v549 = vadd.f32 %v547, %v548
  %v550 = vrot.slane %v549, 1
  %v551 = vadd.f32 %v549, %v550
  %v552 = vsel %vm530, %v507, 0.0
  %v553 = vsel %vm530, %v510, 0.0
  %v554 = vadd.f32 %v552, %v553
  %v555 = vsel %vm530, %v513, 0.0
  %v556 = vadd.f32 %v554, %v555
  %v557 = vsel %vm530, %v516, 0.0
  %v558 = vadd.f32 %v556, %v557
  %v559 = vsel %vm530, %v519, 0.0
  %v560 = vadd.f32 %v558, %v559
  %v561 = vsel %vm530, %v522, 0.0
  %v562 = vadd.f32 %v560, %v561
  %v563 = vsel %vm530, %v525, 0.0
  %v564 = vadd.f32 %v562, %v563
  %v565 = vsel %vm530, %v528, 0.0
  %v566 = vadd.f32 %v564, %v565
  %v567 = vrot.slane %v566, 4
  %v568 = vadd.f32 %v566, %v567
  %v569 = vrot.slane %v568, 2
  %v570 = vadd.f32 %v568, %v569
  %v571 = vrot.slane %v570, 1
  %v572 = vadd.f32 %v570, %v571
  %v573 = vmul.f32 %v551, %v280
  %v574 = vmul.f32 %v572, %v280
  %v575 = vsub.f32 %v483, %v573
  %v576 = vsub.f32 %v486, %v573
  %v577 = vsub.f32 %v489, %v573
  %v578 = vsub.f32 %v492, %v573
  %v579 = vsub.f32 %v495, %v573
  %v580 = vsub.f32 %v498, %v573
  %v581 = vsub.f32 %v501, %v573
  %v582 = vsub.f32 %v504, %v573
  %v583 = vsub.f32 %v507, %v574
  %v584 = vsub.f32 %v510, %v574
  %v585 = vsub.f32 %v513, %v574
  %v586 = vsub.f32 %v516, %v574
  %v587 = vsub.f32 %v519, %v574
  %v588 = vsub.f32 %v522, %v574
  %v589 = vsub.f32 %v525, %v574
  %v590 = vsub.f32 %v528, %v574
  %v591 = vmul.f32 %v575, %v575
  %v592 = vmul.f32 %v576, %v576
  %v593 = vmul.f32 %v577, %v577
  %v594 = vmul.f32 %v578, %v578
  %v595 = vmul.f32 %v579, %v579
  %v596 = vmul.f32 %v580, %v580
  %v597 = vmul.f32 %v581, %v581
  %v598 = vmul.f32 %v582, %v582
  %v599 = vmul.f32 %v583, %v583
  %v600 = vmul.f32 %v584, %v584
  %v601 = vmul.f32 %v585, %v585
  %v602 = vmul.f32 %v586, %v586
  %v603 = vmul.f32 %v587, %v587
  %v604 = vmul.f32 %v588, %v588
  %v605 = vmul.f32 %v589, %v589
  %v606 = vmul.f32 %v590, %v590
  %v607 = vsel %vm530, %v591, 0.0
  %v608 = vsel %vm530, %v592, 0.0
  %v609 = vadd.f32 %v607, %v608
  %v610 = vsel %vm530, %v593, 0.0
  %v611 = vadd.f32 %v609, %v610
  %v612 = vsel %vm530, %v594, 0.0
  %v613 = vadd.f32 %v611, %v612
  %v614 = vsel %vm530, %v595, 0.0
  %v615 = vadd.f32 %v613, %v614
  %v616 = vsel %vm530, %v596, 0.0
  %v617 = vadd.f32 %v615, %v616
  %v618 = vsel %vm530, %v597, 0.0
  %v619 = vadd.f32 %v617, %v618
  %v620 = vsel %vm530, %v598, 0.0
  %v621 = vadd.f32 %v619, %v620
  %v622 = vrot.slane %v621, 4
  %v623 = vadd.f32 %v621, %v622
  %v624 = vrot.slane %v623, 2
  %v625 = vadd.f32 %v623, %v624
  %v626 = vrot.slane %v625, 1
  %v627 = vadd.f32 %v625, %v626
  %v628 = vsel %vm530, %v599, 0.0
  %v629 = vsel %vm530, %v600, 0.0
  %v630 = vadd.f32 %v628, %v629
  %v631 = vsel %vm530, %v601, 0.0
  %v632 = vadd.f32 %v630, %v631
  %v633 = vsel %vm530, %v602, 0.0
  %v634 = vadd.f32 %v632, %v633
  %v635 = vsel %vm530, %v603, 0.0
  %v636 = vadd.f32 %v634, %v635
  %v637 = vsel %vm530, %v604, 0.0
  %v638 = vadd.f32 %v636, %v637
  %v639 = vsel %vm530, %v605, 0.0
  %v640 = vadd.f32 %v638, %v639
  %v641 = vsel %vm530, %v606, 0.0
  %v642 = vadd.f32 %v640, %v641
  %v643 = vrot.slane %v642, 4
  %v644 = vadd.f32 %v642, %v643
  %v645 = vrot.slane %v644, 2
  %v646 = vadd.f32 %v644, %v645
  %v647 = vrot.slane %v646, 1
  %v648 = vadd.f32 %v646, %v647
  %v649 = vmul.f32 %v627, %v280
  %v650 = vmul.f32 %v648, %v280
  %v651 = vadd.f32 %v649, 1e-05
  %v652 = vadd.f32 %v650, 1e-05
  %v653 = vrsqrt.pop %v651
  %v654 = vmul.f32 %v653, %v651
  %v655 = vmul.f32 %v654, %v653
  %v656 = vmul.f32 0.5, %v655
  %v657 = vsub.f32 1.5, %v656
  %v658 = vmul.f32 %v653, %v657
  %vm659 = vweird.f32 %v651
  %vm660 = vweird.f32 %v653
  %vm661 = vmor %vm659, %vm660
  %v662 = vsel %vm661, %v653, %v658
  %v663 = vrsqrt.pop %v652
  %v664 = vmul.f32 %v663, %v652
  %v665 = vmul.f32 %v664, %v663
  %v666 = vmul.f32 0.5, %v665
  %v667 = vsub.f32 1.5, %v666
  %v668 = vmul.f32 %v663, %v667
  %vm669 = vweird.f32 %v652
  %vm670 = vweird.f32 %v663
  %vm671 = vmor %vm669, %vm670
  %v672 = vsel %vm671, %v663, %v668
  %v673 = vmul.f32 %v575, %v662
  %v674 = vmul.f32 %v576, %v662
  %v675 = vmul.f32 %v577, %v662
  %v676 = vmul.f32 %v578, %v662
  %v677 = vmul.f32 %v579, %v662
  %v678 = vmul.f32 %v580, %v662
  %v679 = vmul.f32 %v581, %v662
  %v680 = vmul.f32 %v582, %v662
  %v681 = vmul.f32 %v583, %v672
  %v682 = vmul.f32 %v584, %v672
  %v683 = vmul.f32 %v585, %v672
  %v684 = vmul.f32 %v586, %v672
  %v685 = vmul.f32 %v587, %v672
  %v686 = vmul.f32 %v588, %v672
  %v687 = vmul.f32 %v589, %v672
  %v688 = vmul.f32 %v590, %v672
  %v689 = vmax.f32 %v673, 0.0
  %v690 = vmax.f32 %v674, 0.0
  %v691 = vmax.f32 %v675, 0.0
  %v692 = vmax.f32 %v676, 0.0
  %v693 = vmax.f32 %v677, 0.0
  %v694 = vmax.f32 %v678, 0.0
  %v695 = vmax.f32 %v679, 0.0
  %v696 = vmax.f32 %v680, 0.0
  %v697 = vmax.f32 %v681, 0.0
  %v698 = vmax.f32 %v682, 0.0
  %v699 = vmax.f32 %v683, 0.0
  %v700 = vmax.f32 %v684, 0.0
  %v701 = vmax.f32 %v685, 0.0
  %v702 = vmax.f32 %v686, 0.0
  %v703 = vmax.f32 %v687, 0.0
  %v704 = vmax.f32 %v688, 0.0
  %v705 = vld [vmem:[%s3] sm:$0xff]
  %v706 = vld [vmem:[%s3 + $0x8] sm:$0xff]
  %v707 = vld [vmem:[%s3 + $0x10] sm:$0xff]
  %v708 = vld [vmem:[%s3 + $0x18] sm:$0xff]
  %v709 = vld [vmem:[%s3 + $0x20] sm:$0xff]
  %v710 = vld [vmem:[%s3 + $0x28] sm:$0xff]
  %v711 = vld [vmem:[%s3 + $0x30] sm:$0xff]
  %v712 = vld [vmem:[%s3 + $0x38] sm:$0xff]
  %v714 = vsel %vm530, %v689, 0
  %v717 = vsel %vm530, %v690, 0
  %v720 = vsel %vm530, %v691, 0
  %v723 = vsel %vm530, %v692, 0
  %v726 = vsel %vm530, %v693, 0
  %v729 = vsel %vm530, %v694, 0
  %v732 = vsel %vm530, %v695, 0
  %v735 = vsel %vm530, %v696, 0
  %v738 = vsel %vm530, %v697, 0
  %v741 = vsel %vm530, %v698, 0
  %v744 = vsel %vm530, %v699, 0
  %v747 = vsel %vm530, %v700, 0
  %v750 = vsel %vm530, %v701, 0
  %v753 = vsel %vm530, %v702, 0
  %v756 = vsel %vm530, %v703, 0
  %v759 = vsel %vm530, %v704, 0
  %761 = vmatpush.msra.mxu0 0.0
  %762 = vmatpush.msra.mxu0 0.0
  %763 = vmatpush.msra.mxu0 0.0
  %764 = vmatpush.msra.mxu0 0.0
  %765 = vmatpush.msra.mxu0 0.0
  %766 = vmatpush.msra.mxu0 0.0
  %767 = vmatpush.msra.mxu0 0.0
  %768 = vmatpush.msra.mxu0 0.0
  %769 = vmatpush.msra.mxu0 %v712
  %770 = vmatpush.msra.mxu0 %v711
  %771 = vmatpush.msra.mxu0 %v710
  %772 = vmatpush.msra.mxu0 %v709
  %773 = vmatpush.msra.mxu0 %v708
  %774 = vmatpush.msra.mxu0 %v707
  %775 = vmatpush.msra.mxu0 %v706
  %776 = vmatpush.msra.mxu0 %v705
  %777 = vmatmul.f32.gmra.mxu0 %v714
  %v778 = vpop.f32.mrf.mxu0
  %v779 = vadd.f32 0.0, %v778
  %780 = vmatmul.f32.gmra.mxu0 %v717
  %v781 = vpop.f32.mrf.mxu0
  %v782 = vadd.f32 0.0, %v781
  %783 = vmatmul.f32.gmra.mxu0 %v720
  %v784 = vpop.f32.mrf.mxu0
  %v785 = vadd.f32 0.0, %v784
  %786 = vmatmul.f32.gmra.mxu0 %v723
  %v787 = vpop.f32.mrf.mxu0
  %v788 = vadd.f32 0.0, %v787
  %789 = vmatmul.f32.gmra.mxu0 %v726
  %v790 = vpop.f32.mrf.mxu0
  %v791 = vadd.f32 0.0, %v790
  %792 = vmatmul.f32.gmra.mxu0 %v729
  %v793 = vpop.f32.mrf.mxu0
  %v794 = vadd.f32 0.0, %v793
  %795 = vmatmul.f32.gmra.mxu0 %v732
  %v796 = vpop.f32.mrf.mxu0
  %v797 = vadd.f32 0.0, %v796
  %798 = vmatmul.f32.gmra.mxu0 %v735
  %v799 = vpop.f32.mrf.mxu0
  %v800 = vadd.f32 0.0, %v799
  %801 = vmatmul.f32.gmra.mxu0 %v738
  %v802 = vpop.f32.mrf.mxu0
  %v803 = vadd.f32 0.0, %v802
  %804 = vmatmul.f32.gmra.mxu0 %v741
  %v805 = vpop.f32.mrf.mxu0
  %v806 = vadd.f32 0.0, %v805
  %807 = vmatmul.f32.gmra.mxu0 %v744
  %v808 = vpop.f32.mrf.mxu0
  %v809 = vadd.f32 0.0, %v808
  %810 = vmatmul.f32.gmra.mxu0 %v747
  %v811 = vpop.f32.mrf.mxu0
  %v812 = vadd.f32 0.0, %v811
  %813 = vmatmul.f32.gmra.mxu0 %v750
  %v814 = vpop.f32.mrf.mxu0
  %v815 = vadd.f32 0.0, %v814
  %816 = vmatmul.f32.gmra.mxu0 %v753
  %v817 = vpop.f32.mrf.mxu0
  %v818 = vadd.f32 0.0, %v817
  %819 = vmatmul.f32.gmra.mxu0 %v756
  %v820 = vpop.f32.mrf.mxu0
  %v821 = vadd.f32 0.0, %v820
  %822 = vmatmul.f32.gmra.mxu0 %v759
  %v823 = vpop.f32.mrf.mxu0
  %v824 = vadd.f32 0.0, %v823
  %825 = vdwg.mxu0
  %v826 = vld [vmem:[%s4] sm:$0x1]
  %v828 = vperm.slane %v826, 0
  %v830 = vadd.f32 %v779, %v828
  %v831 = vadd.f32 %v782, %v828
  %v832 = vadd.f32 %v785, %v828
  %v833 = vadd.f32 %v788, %v828
  %v834 = vadd.f32 %v791, %v828
  %v835 = vadd.f32 %v794, %v828
  %v836 = vadd.f32 %v797, %v828
  %v837 = vadd.f32 %v800, %v828
  %v838 = vadd.f32 %v803, %v828
  %v839 = vadd.f32 %v806, %v828
  %v840 = vadd.f32 %v809, %v828
  %v841 = vadd.f32 %v812, %v828
  %v842 = vadd.f32 %v815, %v828
  %v843 = vadd.f32 %v818, %v828
  %v844 = vadd.f32 %v821, %v828
  %v845 = vadd.f32 %v824, %v828
  %846 = vst.msk [vmem:[%s5] sm:$0xff] %vm231, %v830
  %847 = vst.msk [vmem:[%s5 + $0x8] sm:$0xff] %vm231, %v831
  %848 = vst.msk [vmem:[%s5 + $0x10] sm:$0xff] %vm231, %v832
  %849 = vst.msk [vmem:[%s5 + $0x18] sm:$0xff] %vm231, %v833
  %850 = vst.msk [vmem:[%s5 + $0x20] sm:$0xff] %vm231, %v834
  %851 = vst.msk [vmem:[%s5 + $0x28] sm:$0xff] %vm231, %v835
  %852 = vst.msk [vmem:[%s5 + $0x30] sm:$0xff] %vm231, %v836
  %853 = vst.msk [vmem:[%s5 + $0x38] sm:$0xff] %vm231, %v837
  %854 = vst.msk [vmem:[%s5 + $0x40] sm:$0xff] %vm231, %v838
  %855 = vst.msk [vmem:[%s5 + $0x48] sm:$0xff] %vm231, %v839
  %856 = vst.msk [vmem:[%s5 + $0x50] sm:$0xff] %vm231, %v840
  %857 = vst.msk [vmem:[%s5 + $0x58] sm:$0xff] %vm231, %v841
  %858 = vst.msk [vmem:[%s5 + $0x60] sm:$0xff] %vm231, %v842
  %859 = vst.msk [vmem:[%s5 + $0x68] sm:$0xff] %vm231, %v843
  %860 = vst.msk [vmem:[%s5 + $0x70] sm:$0xff] %vm231, %v844
  %861 = vst.msk [vmem:[%s5 + $0x78] sm:$0xff] %vm231, %v845
  // Predicated region
  $region22: #{tpu_custom_call.1} parent=0 // pred_check
    _
  $region23: #{tpu_custom_call.1} parent=0 // pred_check_branch
    %863 = sbr.rel (0) target = $region25
  $region24: #{tpu_custom_call.1} parent=0 // pred_region
    _
  $region25: #{tpu_custom_call.1} parent=0 // pred_fallthru
    _
  // Predicated region
  $region26: #{tpu_custom_call.1} parent=0 // pred_check
    _
  $region27: #{tpu_custom_call.1} parent=0 // pred_check_branch
    %865 = sbr.rel (0) target = $region29
  $region28: #{tpu_custom_call.1} parent=0 // pred_region
    _
  $region29: #{tpu_custom_call.1} parent=0 // pred_fallthru
    _

</llo_original>
